<compile_context>
chip_gen: v6e
topology: v6e:2x2x1
jax: 0.10.0
libtpu: 0.0.40
codegen_flags: <defaults>
</compile_context>

<pallas_src>
import functools

import jax
import jax.numpy as jnp
from jax import lax
from jax.experimental import pallas as pl
from jax.experimental.pallas import tpu as pltpu

_LANES = 128
_SUBLANES = 8


def _cdiv(a, b):
    return (a + b - 1) // b


def _round_up(x, m):
    return ((x + m - 1) // m) * m


def _detect_num_cores():
    # v7x has 2 TensorCores per chip; v5e/v6e have 1. Only split the grid on
    # multi-TC chips. (device_kind string check is the most portable probe;
    # default to 1, which is correct everywhere.)
    try:
        kind = (jax.devices()[0].device_kind or "").lower()
    except Exception:
        return 1
    return 2 if "v7" in kind else 1


def _mse_partial_kernel(t_ref, r_ref, o_ref, *, block_rows, acc_rows, total_rows,
                        need_mask):
    j = pl.program_id(1)

    @pl.when(j == 0)
    def _():
        o_ref[...] = jnp.zeros_like(o_ref)

    # Per-tile cast in VMEM (inputs stay in native dtype in HBM).
    d = t_ref[...].astype(jnp.float32) - r_ref[...].astype(jnp.float32)
    sq = d * d

    def fold(x):
        # Fold the block onto the resident (acc_rows, 128) accumulator with
        # pure VPU adds; acc_rows=64 gives 8 independent vreg chains so the
        # accumulation latency hides under the per-step DMA window.
        return x.reshape(-1, acc_rows, _LANES).sum(axis=0)

    if need_mask:
        # NOTE: int32 row arithmetic -> fine for < 2**31 rows (~2.7e11 elems).
        base = (pl.program_id(0) * pl.num_programs(1) + j) * block_rows
        is_edge = base + block_rows > total_rows

        # Only edge blocks (partial last block / fully-clamped redundant
        # blocks) pay for the iota + compare + select.
        @pl.when(is_edge)
        def _():
            rid = lax.broadcasted_iota(jnp.int32, sq.shape, 0) + base
            o_ref[...] += fold(jnp.where(rid < total_rows, sq, 0.0))

        @pl.when(jnp.logical_not(is_edge))
        def _():
            o_ref[...] += fold(sq)
    else:
        o_ref[...] += fold(sq)


def mse_image_loss(target_image, received_image, *, block_rows=8192, num_cores=None):
    """Mean squared error over all elements, matching torch MSELoss('mean')."""
    assert target_image.shape == received_image.shape

    n_elems = int(target_image.size)
    if num_cores is None:
        num_cores = _detect_num_cores()

    t_flat = target_image.reshape(-1)
    r_flat = received_image.reshape(-1)

    rows = n_elems // _LANES
    main = rows * _LANES
    tail = n_elems - main

    # <128-element tail: trivially summed in the wrapper (no full-array pad).
    tail_sum = jnp.float32(0.0)
    if tail:
        dt = (t_flat[main:].astype(jnp.float32)
              - r_flat[main:].astype(jnp.float32))
        tail_sum = jnp.sum(dt * dt)

    if rows == 0:
        # Degenerate tiny input: everything lives in the tail.
        return tail_sum / jnp.float32(n_elems)

    t2d = (t_flat if tail == 0 else t_flat[:main]).reshape(rows, _LANES)
    r2d = (r_flat if tail == 0 else r_flat[:main]).reshape(rows, _LANES)

    itemsize = max(jnp.dtype(target_image.dtype).itemsize,
                   jnp.dtype(received_image.dtype).itemsize)

    per_core_rows = _cdiv(rows, num_cores)
    # Wider resident accumulator for real workloads; minimal (8,128) for tiny ones.
    acc_rows = 64 if per_core_rows >= 64 else _SUBLANES

    # dtype-aware block size: keep tile bytes ~constant (~4 MiB/input at defaults)
    # regardless of input dtype, shrunk for small images.
    block_rows_eff = max(_round_up(block_rows * 4 // itemsize, acc_rows), acc_rows)
    br = min(block_rows_eff, _round_up(max(per_core_rows, acc_rows), acc_rows))

    num_blocks = _cdiv(rows, br)
    steps = _cdiv(num_blocks, num_cores)
    need_mask = (num_cores * steps * br) != rows

    def in_map(c, j):
        # Clamp so the DMA never targets an out-of-range block; those blocks
        # are fully masked to zero inside the kernel.
        return (jnp.minimum(c * steps + j, num_blocks - 1), 0)

    kernel = functools.partial(
        _mse_partial_kernel,
        block_rows=br, acc_rows=acc_rows, total_rows=rows, need_mask=need_mask,
    )

    cost = pl.CostEstimate(
        flops=3 * n_elems,
        transcendentals=0,
        bytes_accessed=2 * n_elems * itemsize,
    )

    partials = pl.pallas_call(
        kernel,
        out_shape=jax.ShapeDtypeStruct((num_cores, acc_rows, _LANES), jnp.float32),
        grid_spec=pltpu.PrefetchScalarGridSpec(
            num_scalar_prefetch=0,
            grid=(num_cores, steps),
            in_specs=[
                pl.BlockSpec((br, _LANES), in_map),
                pl.BlockSpec((br, _LANES), in_map),
            ],
            out_specs=pl.BlockSpec((None, acc_rows, _LANES), lambda c, j: (c, 0, 0)),
        ),
        compiler_params=pltpu.CompilerParams(
            dimension_semantics=("parallel", "arbitrary"),
            vmem_limit_bytes=32 * 1024 * 1024,
        ),
        cost_estimate=cost,
    )(t2d, r2d)

    return (jnp.sum(partials) + tail_sum) / jnp.float32(n_elems)


if __name__ == "__main__":
    key = jax.random.PRNGKey(0)

    def ref_mse(t, r):
        return jnp.mean((t.astype(jnp.float32) - r.astype(jnp.float32)) ** 2)

    # 1) Primary small NCHW case: batch=2, channels=4, spatial=16.
    k1, k2 = jax.random.split(key)
    target = jax.random.normal(k1, (2, 4, 16, 16), dtype=jnp.float32)
    received = jax.random.normal(k2, (2, 4, 16, 16), dtype=jnp.float32)
    loss = mse_image_loss(target, received)
    jax.block_until_ready(loss)
    assert jnp.allclose(loss, ref_mse(target, received), rtol=1e-5, atol=1e-6), loss

    # 2) Ragged tiling: rows % br != 0 AND num_blocks % num_cores != 0
    #    (partial last block mask + clamped redundant block, forced 2 "cores").
    k3, k4 = jax.random.split(k1)
    t2 = jax.random.normal(k3, (2, 4, 20, 16), dtype=jnp.float32)   # 2560 elems -> 20 rows
    r2 = jax.random.normal(k4, (2, 4, 20, 16), dtype=jnp.float32)
    l2 = mse_image_loss(t2, r2, block_rows=8, num_cores=2)
    jax.block_until_ready(l2)
    assert jnp.allclose(l2, ref_mse(t2, r2), rtol=1e-5, atol=1e-6), l2

    # 3) Non-lane-divisible element count: <128-element tail summed in wrapper.
    k5, k6 = jax.random.split(k2)
    t3 = jax.random.normal(k5, (2, 4, 13, 10), dtype=jnp.float32)   # 1040 = 8*128 + 16
    r3 = jax.random.normal(k6, (2, 4, 13, 10), dtype=jnp.float32)
    l3 = mse_image_loss(t3, r3)
    jax.block_until_ready(l3)
    assert jnp.allclose(l3, ref_mse(t3, r3), rtol=1e-5, atol=1e-6), l3

    # 4) bf16 inputs: in-kernel f32 cast + dtype-aware tile sizing.
    t4 = target.astype(jnp.bfloat16)
    r4 = received.astype(jnp.bfloat16)
    l4 = mse_image_loss(t4, r4)
    jax.block_until_ready(l4)
    assert jnp.allclose(l4, ref_mse(t4, r4), rtol=1e-4, atol=1e-6), l4

    # 5) Wide (64,128) accumulator path with a partial last block.
    k7, k8 = jax.random.split(k3)
    t5 = jax.random.normal(k7, (2, 4, 40, 120), dtype=jnp.float32)  # 38400 elems -> 300 rows
    r5 = jax.random.normal(k8, (2, 4, 40, 120), dtype=jnp.float32)
    l5 = mse_image_loss(t5, r5, block_rows=64)
    jax.block_until_ready(l5)
    assert jnp.allclose(l5, ref_mse(t5, r5), rtol=1e-5, atol=1e-6), l5

    print("KERNEL_OK")
</pallas_src>

<mosaic_0001>
module attributes {stable_mosaic.version = 11 : i64} {
  func.func @_mse_partial_kernel(%arg0: i32, %arg1: i32, %arg2: memref<16x128xf32, #tpu.memory_space<vmem>>, %arg3: memref<16x128xf32, #tpu.memory_space<vmem>>, %arg4: memref<1x8x128xf32, #tpu.memory_space<vmem>>) attributes {dimension_semantics = [#tpu.dimension_semantics<parallel>, #tpu.dimension_semantics<arbitrary>], iteration_bounds = array<i64: 1, 1>, scalar_prefetch = 0 : i64, scratch_operands = 0 : i64, tpu.core_type = #tpu.core_type<tc>, window_params = [{transform_indices = @transform_0, window_bounds = array<i64: 16, 128>}, {transform_indices = @transform_1, window_bounds = array<i64: 16, 128>}, {transform_indices = @transform_2, window_bounds = array<i64: 1, 8, 128>}]} {
    %c0_i32 = arith.constant 0 : i32
    %0 = arith.cmpi eq, %arg1, %c0_i32 : i32
    %1 = arith.extui %0 : i1 to i32
    %c0_i32_0 = arith.constant 0 : i32
    %2 = arith.cmpi ne, %1, %c0_i32_0 : i32
    scf.if %2 {
      %cst_10 = arith.constant 0.000000e+00 : f32
      %15 = vector.broadcast %cst_10 : f32 to vector<8x128xf32>
      %c0_11 = arith.constant 0 : index
      %c0_12 = arith.constant 0 : index
      %c0_13 = arith.constant 0 : index
      %16 = vector.load %arg4[%c0_11, %c0_12, %c0_13] : memref<1x8x128xf32, #tpu.memory_space<vmem>>, vector<1x8x128xf32>
      %17 = vector.shape_cast %16 : vector<1x8x128xf32> to vector<8x128xf32>
      %18 = vector.shape_cast %15 : vector<8x128xf32> to vector<1x8x128xf32>
      tpu.vector_store %arg4[%c0_11, %c0_12, %c0_13], %18 {strides = array<i32>} : memref<1x8x128xf32, #tpu.memory_space<vmem>>, vector<1x8x128xf32>,
    } else {
    }
    %c0 = arith.constant 0 : index
    %c0_1 = arith.constant 0 : index
    %3 = vector.load %arg2[%c0, %c0_1] : memref<16x128xf32, #tpu.memory_space<vmem>>, vector<16x128xf32>
    %c0_2 = arith.constant 0 : index
    %c0_3 = arith.constant 0 : index
    %4 = vector.load %arg3[%c0_2, %c0_3] : memref<16x128xf32, #tpu.memory_space<vmem>>, vector<16x128xf32>
    %5 = arith.subf %3, %4 : vector<16x128xf32>
    %6 = arith.mulf %5, %5 : vector<16x128xf32>
    %c0_4 = arith.constant 0 : index
    %c0_5 = arith.constant 0 : index
    %c0_6 = arith.constant 0 : index
    %7 = vector.load %arg4[%c0_4, %c0_5, %c0_6] : memref<1x8x128xf32, #tpu.memory_space<vmem>>, vector<1x8x128xf32>
    %8 = vector.shape_cast %7 : vector<1x8x128xf32> to vector<8x128xf32>
    %9 = vector.shape_cast %6 : vector<16x128xf32> to vector<2x8x128xf32>
    %cst = arith.constant dense<0.000000e+00> : vector<8x128xf32>
    %10 = vector.multi_reduction <add>, %9, %cst [0] : vector<2x8x128xf32> to vector<8x128xf32>
    %11 = arith.addf %8, %10 : vector<8x128xf32>
    %c0_7 = arith.constant 0 : index
    %c0_8 = arith.constant 0 : index
    %c0_9 = arith.constant 0 : index
    %12 = vector.load %arg4[%c0_7, %c0_8, %c0_9] : memref<1x8x128xf32, #tpu.memory_space<vmem>>, vector<1x8x128xf32>
    %13 = vector.shape_cast %12 : vector<1x8x128xf32> to vector<8x128xf32>
    %14 = vector.shape_cast %11 : vector<8x128xf32> to vector<1x8x128xf32>
    tpu.vector_store %arg4[%c0_7, %c0_8, %c0_9], %14 {strides = array<i32>} : memref<1x8x128xf32, #tpu.memory_space<vmem>>, vector<1x8x128xf32>,
    return
  }
  func.func @transform_0(%arg0: i32, %arg1: i32) -> (i32, i32) {
    %c1_i32 = arith.constant 1 : i32
    %0 = arith.muli %arg0, %c1_i32 : i32
    %1 = arith.addi %0, %arg1 : i32
    %c0_i32 = arith.constant 0 : i32
    %2 = arith.minsi %1, %c0_i32 : i32
    %c0_i32_0 = arith.constant 0 : i32
    %c0_i32_1 = arith.constant 0 : i32
    return %2, %c0_i32_0 : i32, i32
  }
  func.func @transform_1(%arg0: i32, %arg1: i32) -> (i32, i32) {
    %c1_i32 = arith.constant 1 : i32
    %0 = arith.muli %arg0, %c1_i32 : i32
    %1 = arith.addi %0, %arg1 : i32
    %c0_i32 = arith.constant 0 : i32
    %2 = arith.minsi %1, %c0_i32 : i32
    %c0_i32_0 = arith.constant 0 : i32
    %c0_i32_1 = arith.constant 0 : i32
    return %2, %c0_i32_0 : i32, i32
  }
  func.func @transform_2(%arg0: i32, %arg1: i32) -> (i32, i32, i32) {
    %c0_i32 = arith.constant 0 : i32
    %c0_i32_0 = arith.constant 0 : i32
    %c0_i32_1 = arith.constant 0 : i32
    return %arg0, %c0_i32, %c0_i32_0 : i32, i32, i32
  }
}

</mosaic_0001>

<llo_original>
// kernel: tpu_custom_call.1
$region0: #{tpu_custom_call.1}
  #allocation0 [shape = 'u32[]', space=smem, size = 0x4, offset = 0x4, fixed_abs, tag = 'smem constant byte address 0x4 - core index']
  #allocation1 [shape = 'u32[144,128]{1,0:T(1,128)}', space=vmem, size = 0x12000, scoped, tag = 'internal scratch']
  %s0 = inlined_call_operand.hbm [shape: f32[16,128], index: 0, kind: input, shape index: {}]
  %s1 = inlined_call_operand.hbm [shape: f32[16,128], index: 1, kind: input, shape index: {}]
  %s2 = inlined_call_operand.hbm [shape: f32[1,8,128], index: 2, kind: output, shape index: {}]
  %s3 = sld [smem:[#allocation0]]
  $region30: #{tpu_custom_call.1} parent=0
    _
  %s5 = ssub.s32 1, %s3
  %s6 = scalar_select 0, %s5, %s3
  $region1: #{tpu_custom_call.1} parent=0
    #allocation2 [shape = 'u8[8192]{0}', space=vmem, size = 0x2000, scoped, tag = 'input window, operand 0, single buffered']
    #allocation3 [shape = 's32[1]{0}', space=sflag, size = 0x4, scoped, tag = 'scoped memory for tpu_custom_call.1']
    #allocation4 [shape = 's32[1]{0}', space=sflag, size = 0x4, scoped, tag = 'scoped memory for tpu_custom_call.1']
    #allocation5 [shape = 'u8[8192]{0}', space=vmem, size = 0x2000, scoped, tag = 'input window, operand 1, single buffered']
    #allocation6 [shape = 's32[1]{0}', space=sflag, size = 0x4, scoped, tag = 'scoped memory for tpu_custom_call.1']
    #allocation7 [shape = 'u8[4096]{0}', space=vmem, size = 0x1000, scoped, tag = 'output window, operand 0, single buffered']
    %7 = vsyncpa [#allocation3], 0
    %8 = vsyncpa [#allocation6], 0
    %9 = vsyncpa [#allocation4], 0
    // Predicated region
    $region2: #{tpu_custom_call.1} parent=1 // pred_check
      _
    $region3: #{tpu_custom_call.1} parent=1 // pred_check_branch
      %11 = sbr.rel (0) target = $region5
    $region4: #{tpu_custom_call.1} parent=1 // pred_region
      %s12 = sadd.s32 0, 0
      %p13 = scmp.lt.s32.totalorder %s12, 0
      %s14 = scalar_select %p13, %s12, 0
      %s15 = smul.u32 2, %s14
      %s17 = ssub.s32 256, 256
      %18 = vsyncadd [#allocation3], %s17
      %s19 = smul.addr %s15, 128
      %s20 = scalar_lea.hbm %s0, %s19
      %s21 = sshll.u32 [#allocation2], 4
      %s22 = int_to_ptr.vmem [resolvable:$true] %s21
      %27 = dma.hbm_to_vmem [thread:$0]  %s20, 256, %s22, [#allocation3], 128, 128, 8
    $region5: #{tpu_custom_call.1} parent=1 // pred_fallthru
      _
    // Predicated region
    $region6: #{tpu_custom_call.1} parent=1 // pred_check
      _
    $region7: #{tpu_custom_call.1} parent=1 // pred_check_branch
      %29 = sbr.rel (0) target = $region9
    $region8: #{tpu_custom_call.1} parent=1 // pred_region
      %s30 = sadd.s32 0, 0
      %p31 = scmp.lt.s32.totalorder %s30, 0
      %s32 = scalar_select %p31, %s30, 0
      %s33 = smul.u32 2, %s32
      %s35 = ssub.s32 256, 256
      %36 = vsyncadd [#allocation6], %s35
      %s37 = smul.addr %s33, 128
      %s38 = scalar_lea.hbm %s1, %s37
      %s39 = sshll.u32 [#allocation5], 4
      %s40 = int_to_ptr.vmem [resolvable:$true] %s39
      %45 = dma.hbm_to_vmem [thread:$0]  %s38, 256, %s40, [#allocation6], 128, 128, 8
    $region9: #{tpu_custom_call.1} parent=1 // pred_fallthru
      _
    // Predicated region
    $region10: #{tpu_custom_call.1} parent=1 // pred_check
      _
    $region11: #{tpu_custom_call.1} parent=1 // pred_check_branch
      %47 = sbr.rel (0) target = $region13
    $region12: #{tpu_custom_call.1} parent=1 // pred_region
      %48 = dma.done [#allocation3], 256
    $region13: #{tpu_custom_call.1} parent=1 // pred_fallthru
      _
    // Predicated region
    $region14: #{tpu_custom_call.1} parent=1 // pred_check
      _
    $region15: #{tpu_custom_call.1} parent=1 // pred_check_branch
      %50 = sbr.rel (0) target = $region17
    $region16: #{tpu_custom_call.1} parent=1 // pred_region
      %51 = dma.done [#allocation6], 256
    $region17: #{tpu_custom_call.1} parent=1 // pred_fallthru
      _
    %s52 = sadd.s32 0, 0
    %p53 = scmp.lt.s32.totalorder %s52, 0
    %s54 = scalar_select %p53, %s52, 0
    %s55 = smul.u32 2, %s54
    %s56 = sadd.s32 0, 0
    %p57 = scmp.lt.s32.totalorder %s56, 0
    %s58 = scalar_select %p57, %s56, 0
    %s59 = smul.u32 2, %s58
    %p60 = scmp.eq.s32.totalorder 0, 0
    // Predicated region
    $region18: #{tpu_custom_call.1} parent=1 // pred_check
      %p61 = pneg %p60
    $region19: #{tpu_custom_call.1} parent=1 // pred_check_branch
      %63 = sbr.rel (%p61) target = $region21
    $region20: #{tpu_custom_call.1} parent=1 // pred_region
      %64 = vst [vmem:[#allocation7] sm:$0xff] 0.0
    $region21: #{tpu_custom_call.1} parent=1 // pred_fallthru
      _
    %v65 = vld [vmem:[#allocation2] sm:$0xff]
    %v66 = vld [vmem:[#allocation2 + $0x8] sm:$0xff]
    %v67 = vld [vmem:[#allocation5] sm:$0xff]
    %v68 = vld [vmem:[#allocation5 + $0x8] sm:$0xff]
    %v69 = vsub.f32 %v65, %v67
    %v70 = vsub.f32 %v66, %v68
    %v71 = vmul.f32 %v69, %v69
    %v72 = vmul.f32 %v70, %v70
    %v73 = vld [vmem:[#allocation7] sm:$0xff]
    %v74 = vadd.f32 %v71, %v72
    %v75 = vadd.f32 %v73, %v74
    %76 = vst [vmem:[#allocation7] sm:$0xff] %v75
    // Predicated region
    $region22: #{tpu_custom_call.1} parent=1 // pred_check
      _
    $region23: #{tpu_custom_call.1} parent=1 // pred_check_branch
      %78 = sbr.rel (0) target = $region25
    $region24: #{tpu_custom_call.1} parent=1 // pred_region
      %s80 = ssub.s32 128, 128
      %81 = vsyncadd [#allocation4], %s80
      %s83 = sshll.u32 [#allocation7], 4
      %s84 = int_to_ptr.vmem [resolvable:$true] %s83
      %86 = dma.vmem_to_hbm [thread:$0]  %s84, 128, %s2, [#allocation4]
    $region25: #{tpu_custom_call.1} parent=1 // pred_fallthru
      _
    // Predicated region
    $region26: #{tpu_custom_call.1} parent=1 // pred_check
      _
    $region27: #{tpu_custom_call.1} parent=1 // pred_check_branch
      %88 = sbr.rel (0) target = $region29
    $region28: #{tpu_custom_call.1} parent=1 // pred_region
      %89 = dma.done [#allocation4], 128
    $region29: #{tpu_custom_call.1} parent=1 // pred_fallthru
      _
    %90 = vsyncpa [#allocation3], 1
    %91 = vsyncpa [#allocation6], 1
    %92 = vsyncpa [#allocation4], 1

</llo_original>
